<compile_context>
chip_gen: v5e
topology: v5e:2x2
jax: 0.10.0
libtpu: 0.0.40
codegen_flags: <defaults>
</compile_context>

<pallas_src>
import functools

import jax
import jax.numpy as jnp
import numpy as np
from jax import lax
from jax.experimental import pallas as pl
from jax.experimental.pallas import tpu as pltpu

LANES = 128
SUBLANES = 8
VREG_ELEMS = LANES * SUBLANES          # 1024 f32 elements = one vreg
DEFAULT_BLOCK_ROWS = 4096              # (4096, 128) f32 = 2 MiB per buffer

# Deterministic "parameters" from __init__ (unused by the live forward path).
SOBEL_X = np.array([[1.0, 2.0, 1.0], [0.0, 0.0, 0.0], [-1.0, -2.0, -1.0]],
                   dtype=np.float32)[None, None]
SOBEL_Y = np.transpose(SOBEL_X, (0, 1, 3, 2))


def _cdiv(a, b):
    return -(-a // b)


def _round_up(a, b):
    return _cdiv(a, b) * b


def _num_tensorcores():
    """Best-effort TensorCore count of the local chip (1 on v5e/v6e, 2 on v7x)."""
    try:
        info = pltpu.get_tpu_info()
        for name in ("tensorcore_count", "num_tensorcores", "num_cores",
                     "core_count"):
            n = getattr(info, name, None)
            if n:
                return max(1, int(n))
    except Exception:
        pass
    try:
        kind = jax.devices()[0].device_kind.lower()
        if "v7" in kind:
            return 2
    except Exception:
        pass
    return 1


def _dist_and_valid(p, t, *, min_dist, max_dist, no_disparity, no_pred_log,
                    extra_valid=None):
    """dist (exactly 0 on invalid elements) + validity mask, matching torch."""
    if no_disparity:
        valid = (t >= min_dist) & (t <= max_dist)
    else:
        valid = (t <= 1.0 / min_dist) & (t >= 1.0 / max_dist)
    if extra_valid is not None:
        valid = valid & extra_valid
    # log(1) == 0 on invalid lanes; base selected to 0 there -> dist == 0
    # exactly, so invalid / stale elements never contribute (and never NaN).
    log_t = jnp.log(jnp.where(valid, t, 1.0))
    if no_pred_log:
        base = jnp.log(jnp.where(valid, p + 1e-10, 1.0))
    else:
        base = jnp.where(valid, p, 0.0)
    # no_disparity: dist = base - log(t);  disparity: target -> 1/t so
    # dist = base - log(1/t) = base + log(t)   (fold, no f32 divide).
    dist = (base - log_t) if no_disparity else (base + log_t)
    return dist, valid


def _si_partial_kernel(pred_ref, target_ref, s1_ref, s2_ref, cnt_ref, *,
                       rows, block_rows, blocks_per_split, masked_possible,
                       min_dist, max_dist, no_disparity, no_pred_log):
    c = pl.program_id(0)          # core-split index  ("parallel")
    i = pl.program_id(1)          # reduction step    ("arbitrary")

    # Output blocks are resident across the "arbitrary" axis -> use them
    # directly as (8,128) accumulators.
    @pl.when(i == 0)
    def _():
        s1_ref[...] = jnp.zeros_like(s1_ref)
        s2_ref[...] = jnp.zeros_like(s2_ref)
        cnt_ref[...] = jnp.zeros_like(cnt_ref)

    p = pred_ref[...].astype(jnp.float32)
    t = target_ref[...].astype(jnp.float32)

    def accumulate(extra_valid):
        dist, valid = _dist_and_valid(
            p, t, min_dist=min_dist, max_dist=max_dist,
            no_disparity=no_disparity, no_pred_log=no_pred_log,
            extra_valid=extra_valid)
        n = block_rows // SUBLANES
        d3 = dist.reshape(n, SUBLANES, LANES)
        v3 = valid.astype(jnp.float32).reshape(n, SUBLANES, LANES)
        # (n,8,128) -> (8,128): elementwise adds across the vreg axis (VPU),
        # keeping a blocked/per-lane accumulation structure for f32 accuracy.
        s1_ref[...] += jnp.sum(d3, axis=0)
        s2_ref[...] += jnp.sum(d3 * d3, axis=0)
        cnt_ref[...] += jnp.sum(v3, axis=0)

    if masked_possible:
        # Only the partial last block of the data / the clamped duplicate
        # block of an uneven split needs the row mask; interior blocks take
        # the cheap path with no iota / compare / and.
        blk = c * blocks_per_split + i          # unclamped logical block index
        needs_mask = (blk + 1) * block_rows > rows

        @pl.when(needs_mask)
        def _():
            row_idx = blk * block_rows + lax.broadcasted_iota(
                jnp.int32, (block_rows, LANES), 0)
            accumulate(row_idx < rows)

        @pl.when(jnp.logical_not(needs_mask))
        def _():
            accumulate(None)
    else:
        accumulate(None)


@functools.partial(jax.jit, static_argnames=("min_dist", "max_dist",
                                             "no_disparity", "no_pred_log"))
def scale_invariant_loss(pred, target, *, min_dist, max_dist,
                         no_disparity=False, no_pred_log=False):
    min_dist = float(min_dist)
    max_dist = float(max_dist)
    no_disparity = bool(no_disparity)
    no_pred_log = bool(no_pred_log)

    total = int(np.prod(pred.shape))
    pred_flat = pred.reshape(-1)
    target_flat = target.reshape(-1)

    # Kernel handles the vreg-aligned prefix; the <1024-element tail (if any)
    # is folded in with plain jnp ops -- no full-array concat / pad copy.
    main = (total // VREG_ELEMS) * VREG_ELEMS
    tail = total - main

    s1 = jnp.float32(0.0)
    s2 = jnp.float32(0.0)
    cnt = jnp.float32(0.0)

    if main > 0:
        rows = main // LANES                               # multiple of 8
        pred2d = pred_flat[:main].reshape(rows, LANES)
        target2d = target_flat[:main].reshape(rows, LANES)

        block_rows = min(DEFAULT_BLOCK_ROWS, rows)
        nblocks = _cdiv(rows, block_rows)
        nsplit = max(1, min(_num_tensorcores(), nblocks))  # 1 on v5e/v6e

        if nsplit > 1 and nblocks % nsplit != 0:
            # Best effort: pick a block size whose block count divides evenly
            # across the splits, so no split runs a wasted duplicate block.
            tgt = _round_up(nblocks, nsplit)
            alt_rows = _round_up(_cdiv(rows, tgt), SUBLANES)
            if alt_rows >= SUBLANES and _cdiv(rows, alt_rows) % nsplit == 0:
                block_rows = alt_rows
                nblocks = _cdiv(rows, alt_rows)

        bps = _cdiv(nblocks, nsplit)                       # blocks per split
        has_duplicate = nsplit * bps != nblocks
        masked_possible = (rows % block_rows != 0) or has_duplicate

        if has_duplicate:
            # Clamp keeps the DMA in bounds for the duplicate iteration of
            # the longer split; the in-kernel row mask zeroes its contribution.
            in_map = lambda c, i: (jnp.minimum(c * bps + i, nblocks - 1), 0)
        else:
            in_map = lambda c, i: (c * bps + i, 0)
        out_map = lambda c, i: (c, 0)

        kernel = functools.partial(
            _si_partial_kernel,
            rows=rows, block_rows=block_rows, blocks_per_split=bps,
            masked_possible=masked_possible,
            min_dist=min_dist, max_dist=max_dist,
            no_disparity=no_disparity, no_pred_log=no_pred_log)

        part_shape = jax.ShapeDtypeStruct((nsplit * SUBLANES, LANES),
                                          jnp.float32)
        s1_p, s2_p, cnt_p = pl.pallas_call(
            kernel,
            out_shape=(part_shape, part_shape, part_shape),
            grid_spec=pltpu.PrefetchScalarGridSpec(
                num_scalar_prefetch=0,
                grid=(nsplit, bps),
                in_specs=[pl.BlockSpec((block_rows, LANES), in_map),
                          pl.BlockSpec((block_rows, LANES), in_map)],
                out_specs=[pl.BlockSpec((SUBLANES, LANES), out_map)] * 3,
            ),
            compiler_params=pltpu.CompilerParams(
                dimension_semantics=("parallel", "arbitrary")),
        )(pred2d, target2d)

        s1 = s1 + jnp.sum(s1_p)
        s2 = s2 + jnp.sum(s2_p)
        cnt = cnt + jnp.sum(cnt_p)

    if tail > 0:
        p_t = pred_flat[main:].astype(jnp.float32)
        t_t = target_flat[main:].astype(jnp.float32)
        dist_t, valid_t = _dist_and_valid(
            p_t, t_t, min_dist=min_dist, max_dist=max_dist,
            no_disparity=no_disparity, no_pred_log=no_pred_log)
        s1 = s1 + jnp.sum(dist_t)
        s2 = s2 + jnp.sum(dist_t * dist_t)
        cnt = cnt + jnp.sum(valid_t.astype(jnp.float32))

    # torch: mse = mean(dist**2) over the compacted valid elements;
    # scale = sum(dist)^2 / numel(dist)^2.  cnt == 0 -> NaN (torch parity).
    mse = s2 / cnt
    scale = (s1 * s1) / (cnt * cnt)
    loss = 10.0 * jnp.sqrt(mse - 0.85 * scale + 1e-5)

    return {'total_loss': loss + 0.0,
            'loss': loss,
            'texture_loss': jnp.float32(0.0)}


def _reference(pred, target, *, min_dist, max_dist, no_disparity, no_pred_log):
    # Pure-JAX mirror of the PyTorch forward (valid-element compaction
    # replaced by masking; same sums / same denominators).
    p = pred.reshape(-1).astype(jnp.float32)
    t = target.reshape(-1).astype(jnp.float32)
    if no_disparity:
        mask = (t < min_dist) | (t > max_dist)
        t_mod = t
    else:
        mask = (t > 1.0 / min_dist) | (t < 1.0 / max_dist)
        t_mod = 1.0 / t
    valid = ~mask
    log_t = jnp.log(jnp.where(valid, t_mod, 1.0))
    if no_pred_log:
        dist = jnp.log(p + 1e-10) - log_t
    else:
        dist = p - log_t
    dist = jnp.where(valid, dist, 0.0)
    cnt = jnp.sum(valid.astype(jnp.float32))
    mse = jnp.sum(dist * dist) / cnt
    scale = jnp.sum(dist) ** 2 / cnt ** 2
    return 10.0 * jnp.sqrt(mse - 0.85 * scale + 1e-5)


if __name__ == "__main__":
    def check(pred, target, cfg, rtol=2e-4, atol=1e-4):
        out = scale_invariant_loss(pred, target, **cfg)
        jax.block_until_ready(out['loss'])
        ref = _reference(pred, target, **cfg)
        np.testing.assert_allclose(np.asarray(out['loss']), np.asarray(ref),
                                   rtol=rtol, atol=atol)
        assert np.allclose(np.asarray(out['total_loss']),
                           np.asarray(out['loss']))
        return out

    cfg = dict(min_dist=0.5, max_dist=10.0, no_disparity=False,
               no_pred_log=False)

    # Case 1: small NCHW depth map -> single (16,128) block, single split,
    # fast (unmasked) path only.
    kp, kt = jax.random.split(jax.random.PRNGKey(0))
    pred = jax.random.normal(kp, (2, 1, 32, 32), dtype=jnp.float32)
    target = jax.random.uniform(kt, (2, 1, 32, 32), dtype=jnp.float32,
                                minval=0.05, maxval=3.0)
    check(pred, target, cfg)

    # Case 2: larger map -> multi-block grid with a partial last block;
    # exercises the steady-state fast path plus the masked boundary path.
    kp2, kt2 = jax.random.split(jax.random.PRNGKey(1))
    pred2 = jax.random.normal(kp2, (2, 1, 768, 360), dtype=jnp.float32)
    target2 = jax.random.uniform(kt2, (2, 1, 768, 360), dtype=jnp.float32,
                                 minval=0.05, maxval=3.0)
    check(pred2, target2, cfg)

    # Case 3: numel not a multiple of 1024 -> kernel prefix + jnp tail
    # combine, with the no_disparity / no_pred_log flag path.
    cfg3 = dict(min_dist=0.5, max_dist=10.0, no_disparity=True,
                no_pred_log=True)
    kp3, kt3 = jax.random.split(jax.random.PRNGKey(2))
    pred3 = jax.random.uniform(kp3, (1, 1, 48, 41), dtype=jnp.float32,
                               minval=0.1, maxval=5.0)
    target3 = jax.random.uniform(kt3, (1, 1, 48, 41), dtype=jnp.float32,
                                 minval=0.05, maxval=12.0)
    check(pred3, target3, cfg3)

    print("KERNEL_OK")
</pallas_src>

<mosaic_0001>
module attributes {stable_mosaic.version = 11 : i64} {
  func.func @_si_partial_kernel(%arg0: i32, %arg1: i32, %arg2: memref<16x128xf32, #tpu.memory_space<vmem>>, %arg3: memref<16x128xf32, #tpu.memory_space<vmem>>, %arg4: memref<8x128xf32, #tpu.memory_space<vmem>>, %arg5: memref<8x128xf32, #tpu.memory_space<vmem>>, %arg6: memref<8x128xf32, #tpu.memory_space<vmem>>) attributes {dimension_semantics = [#tpu.dimension_semantics<parallel>, #tpu.dimension_semantics<arbitrary>], iteration_bounds = array<i64: 1, 1>, scalar_prefetch = 0 : i64, scratch_operands = 0 : i64, tpu.core_type = #tpu.core_type<tc>, window_params = [{transform_indices = @transform_0, window_bounds = array<i64: 16, 128>}, {transform_indices = @transform_1, window_bounds = array<i64: 16, 128>}, {transform_indices = @transform_2, window_bounds = array<i64: 8, 128>}, {transform_indices = @transform_3, window_bounds = array<i64: 8, 128>}, {transform_indices = @transform_4, window_bounds = array<i64: 8, 128>}]} {
    %c0_i32 = arith.constant 0 : i32
    %0 = arith.cmpi eq, %arg1, %c0_i32 : i32
    %1 = arith.extui %0 : i1 to i32
    %c0_i32_0 = arith.constant 0 : i32
    %2 = arith.cmpi ne, %1, %c0_i32_0 : i32
    scf.if %2 {
      %cst_22 = arith.constant 0.000000e+00 : f32
      %33 = vector.broadcast %cst_22 : f32 to vector<8x128xf32>
      %c0_23 = arith.constant 0 : index
      %c0_24 = arith.constant 0 : index
      %34 = vector.load %arg4[%c0_23, %c0_24] : memref<8x128xf32, #tpu.memory_space<vmem>>, vector<8x128xf32>
      tpu.vector_store %arg4[%c0_23, %c0_24], %33 {strides = array<i32>} : memref<8x128xf32, #tpu.memory_space<vmem>>, vector<8x128xf32>,
      %cst_25 = arith.constant 0.000000e+00 : f32
      %35 = vector.broadcast %cst_25 : f32 to vector<8x128xf32>
      %c0_26 = arith.constant 0 : index
      %c0_27 = arith.constant 0 : index
      %36 = vector.load %arg5[%c0_26, %c0_27] : memref<8x128xf32, #tpu.memory_space<vmem>>, vector<8x128xf32>
      tpu.vector_store %arg5[%c0_26, %c0_27], %35 {strides = array<i32>} : memref<8x128xf32, #tpu.memory_space<vmem>>, vector<8x128xf32>,
      %cst_28 = arith.constant 0.000000e+00 : f32
      %37 = vector.broadcast %cst_28 : f32 to vector<8x128xf32>
      %c0_29 = arith.constant 0 : index
      %c0_30 = arith.constant 0 : index
      %38 = vector.load %arg6[%c0_29, %c0_30] : memref<8x128xf32, #tpu.memory_space<vmem>>, vector<8x128xf32>
      tpu.vector_store %arg6[%c0_29, %c0_30], %37 {strides = array<i32>} : memref<8x128xf32, #tpu.memory_space<vmem>>, vector<8x128xf32>,
    } else {
    }
    %c0 = arith.constant 0 : index
    %c0_1 = arith.constant 0 : index
    %3 = vector.load %arg2[%c0, %c0_1] : memref<16x128xf32, #tpu.memory_space<vmem>>, vector<16x128xf32>
    %c0_2 = arith.constant 0 : index
    %c0_3 = arith.constant 0 : index
    %4 = vector.load %arg3[%c0_2, %c0_3] : memref<16x128xf32, #tpu.memory_space<vmem>>, vector<16x128xf32>
    %cst = arith.constant 2.000000e+00 : f32
    %5 = vector.broadcast %cst : f32 to vector<16x128xf32>
    %6 = arith.cmpf ole, %4, %5 : vector<16x128xf32>
    %cst_4 = arith.constant 1.000000e-01 : f32
    %7 = vector.broadcast %cst_4 : f32 to vector<16x128xf32>
    %8 = arith.cmpf oge, %4, %7 : vector<16x128xf32>
    %9 = arith.andi %6, %8 : vector<16x128xi1>
    %cst_5 = arith.constant 1.000000e+00 : f32
    %10 = vector.broadcast %cst_5 : f32 to vector<16x128xf32>
    %11 = arith.select %9, %4, %10 : vector<16x128xi1>, vector<16x128xf32>
    %12 = math.log %11 : vector<16x128xf32>
    %cst_6 = arith.constant 0.000000e+00 : f32
    %13 = vector.broadcast %cst_6 : f32 to vector<16x128xf32>
    %14 = arith.select %9, %3, %13 : vector<16x128xi1>, vector<16x128xf32>
    %15 = arith.addf %14, %12 : vector<16x128xf32>
    %16 = vector.shape_cast %15 : vector<16x128xf32> to vector<2x8x128xf32>
    %17 = arith.extui %9 : vector<16x128xi1> to vector<16x128xi32>
    %18 = arith.sitofp %17 : vector<16x128xi32> to vector<16x128xf32>
    %19 = vector.shape_cast %18 : vector<16x128xf32> to vector<2x8x128xf32>
    %c0_7 = arith.constant 0 : index
    %c0_8 = arith.constant 0 : index
    %20 = vector.load %arg4[%c0_7, %c0_8] : memref<8x128xf32, #tpu.memory_space<vmem>>, vector<8x128xf32>
    %cst_9 = arith.constant dense<0.000000e+00> : vector<8x128xf32>
    %21 = vector.multi_reduction <add>, %16, %cst_9 [0] : vector<2x8x128xf32> to vector<8x128xf32>
    %22 = arith.addf %20, %21 : vector<8x128xf32>
    %c0_10 = arith.constant 0 : index
    %c0_11 = arith.constant 0 : index
    %23 = vector.load %arg4[%c0_10, %c0_11] : memref<8x128xf32, #tpu.memory_space<vmem>>, vector<8x128xf32>
    tpu.vector_store %arg4[%c0_10, %c0_11], %22 {strides = array<i32>} : memref<8x128xf32, #tpu.memory_space<vmem>>, vector<8x128xf32>,
    %c0_12 = arith.constant 0 : index
    %c0_13 = arith.constant 0 : index
    %24 = vector.load %arg5[%c0_12, %c0_13] : memref<8x128xf32, #tpu.memory_space<vmem>>, vector<8x128xf32>
    %25 = arith.mulf %16, %16 : vector<2x8x128xf32>
    %cst_14 = arith.constant dense<0.000000e+00> : vector<8x128xf32>
    %26 = vector.multi_reduction <add>, %25, %cst_14 [0] : vector<2x8x128xf32> to vector<8x128xf32>
    %27 = arith.addf %24, %26 : vector<8x128xf32>
    %c0_15 = arith.constant 0 : index
    %c0_16 = arith.constant 0 : index
    %28 = vector.load %arg5[%c0_15, %c0_16] : memref<8x128xf32, #tpu.memory_space<vmem>>, vector<8x128xf32>
    tpu.vector_store %arg5[%c0_15, %c0_16], %27 {strides = array<i32>} : memref<8x128xf32, #tpu.memory_space<vmem>>, vector<8x128xf32>,
    %c0_17 = arith.constant 0 : index
    %c0_18 = arith.constant 0 : index
    %29 = vector.load %arg6[%c0_17, %c0_18] : memref<8x128xf32, #tpu.memory_space<vmem>>, vector<8x128xf32>
    %cst_19 = arith.constant dense<0.000000e+00> : vector<8x128xf32>
    %30 = vector.multi_reduction <add>, %19, %cst_19 [0] : vector<2x8x128xf32> to vector<8x128xf32>
    %31 = arith.addf %29, %30 : vector<8x128xf32>
    %c0_20 = arith.constant 0 : index
    %c0_21 = arith.constant 0 : index
    %32 = vector.load %arg6[%c0_20, %c0_21] : memref<8x128xf32, #tpu.memory_space<vmem>>, vector<8x128xf32>
    tpu.vector_store %arg6[%c0_20, %c0_21], %31 {strides = array<i32>} : memref<8x128xf32, #tpu.memory_space<vmem>>, vector<8x128xf32>,
    return
  }
  func.func @transform_0(%arg0: i32, %arg1: i32) -> (i32, i32) {
    %c1_i32 = arith.constant 1 : i32
    %0 = arith.muli %arg0, %c1_i32 : i32
    %1 = arith.addi %0, %arg1 : i32
    %c0_i32 = arith.constant 0 : i32
    %c0_i32_0 = arith.constant 0 : i32
    return %1, %c0_i32 : i32, i32
  }
  func.func @transform_1(%arg0: i32, %arg1: i32) -> (i32, i32) {
    %c1_i32 = arith.constant 1 : i32
    %0 = arith.muli %arg0, %c1_i32 : i32
    %1 = arith.addi %0, %arg1 : i32
    %c0_i32 = arith.constant 0 : i32
    %c0_i32_0 = arith.constant 0 : i32
    return %1, %c0_i32 : i32, i32
  }
  func.func @transform_2(%arg0: i32, %arg1: i32) -> (i32, i32) {
    %c0_i32 = arith.constant 0 : i32
    %c0_i32_0 = arith.constant 0 : i32
    return %arg0, %c0_i32 : i32, i32
  }
  func.func @transform_3(%arg0: i32, %arg1: i32) -> (i32, i32) {
    %c0_i32 = arith.constant 0 : i32
    %c0_i32_0 = arith.constant 0 : i32
    return %arg0, %c0_i32 : i32, i32
  }
  func.func @transform_4(%arg0: i32, %arg1: i32) -> (i32, i32) {
    %c0_i32 = arith.constant 0 : i32
    %c0_i32_0 = arith.constant 0 : i32
    return %arg0, %c0_i32 : i32, i32
  }
}

</mosaic_0001>

<llo_original>
// kernel: scale_invariant_loss.1
$region0: #{scale_invariant_loss.1}
  #allocation0 [shape = 'u32[]', space=smem, size = 0x4, offset = 0x4, fixed_abs, tag = 'smem constant byte address 0x4 - core index']
  #allocation1 [shape = 'u32[72,128]{1,0:T(1,128)}', space=vmem, size = 0x9000, scoped, tag = 'internal scratch']
  %s0 = inlined_call_operand.vmem [shape: f32[16,128], index: 0, kind: input, shape index: {}]
  %s1 = inlined_call_operand.vmem [shape: f32[16,128], index: 1, kind: input, shape index: {}]
  %s2 = inlined_call_operand.vmem [shape: f32[8,128], index: 2, kind: output, shape index: {0}]
  %s3 = inlined_call_operand.vmem [shape: f32[8,128], index: 3, kind: output, shape index: {1}]
  %s4 = inlined_call_operand.vmem [shape: f32[8,128], index: 4, kind: output, shape index: {2}]
  %5 = xla_tuple %s2, %s3, %s4
  %s6 = sld [smem:[#allocation0]]
  $region38: #{scale_invariant_loss.1} parent=0
    _
  %s8 = ssub.s32 1, %s6
  %s9 = scalar_select 0, %s8, %s6
  // Predicated region
  $region2: #{scale_invariant_loss.1} parent=0 // pred_check
    _
  $region3: #{scale_invariant_loss.1} parent=0 // pred_check_branch
    %11 = sbr.rel (0) target = $region5
  $region4: #{scale_invariant_loss.1} parent=0 // pred_region
    %s12 = sadd.s32 0, 0
    %s13 = smul.u32 2, %s12
    %p14 = scmp.lt.s32.totalorder %s13, 1
    %s15 = scalar_select %p14, %s13, 1
    %s16 = smul.addr %s15, 8
    %s17 = scalar_lea.vmem %s0, %s16
    %s18 = sadd.s32 0, 0
    %s19 = smul.u32 2, %s18
  $region5: #{scale_invariant_loss.1} parent=0 // pred_fallthru
    _
  // Predicated region
  $region6: #{scale_invariant_loss.1} parent=0 // pred_check
    _
  $region7: #{scale_invariant_loss.1} parent=0 // pred_check_branch
    %21 = sbr.rel (0) target = $region9
  $region8: #{scale_invariant_loss.1} parent=0 // pred_region
    %s22 = sadd.s32 0, 0
    %s23 = smul.u32 2, %s22
    %p24 = scmp.lt.s32.totalorder %s23, 1
    %s25 = scalar_select %p24, %s23, 1
    %s26 = smul.addr %s25, 8
    %s27 = scalar_lea.vmem %s1, %s26
    %s28 = sadd.s32 0, 0
    %s29 = smul.u32 2, %s28
  $region9: #{scale_invariant_loss.1} parent=0 // pred_fallthru
    _
  %s30 = sadd.s32 0, 0
  %s31 = smul.u32 2, %s30
  %p32 = scmp.lt.s32.totalorder %s31, 1
  %s33 = scalar_select %p32, %s31, 1
  %s34 = smul.addr %s33, 8
  %s35 = scalar_lea.vmem %s0, %s34
  %s36 = sadd.s32 0, 0
  %s37 = smul.u32 2, %s36
  %p38 = scmp.lt.s32.totalorder %s37, 1
  %s39 = scalar_select %p38, %s37, 1
  %s40 = smul.addr %s39, 8
  %s41 = scalar_lea.vmem %s1, %s40
  %s42 = sadd.s32 0, 0
  %s43 = smul.u32 2, %s42
  %p44 = scmp.lt.s32.totalorder %s43, 1
  %s45 = scalar_select %p44, %s43, 1
  %s46 = smul.addr %s45, 8
  %s47 = scalar_lea.vmem %s0, %s46
  %s48 = sadd.s32 0, 0
  %s49 = smul.u32 2, %s48
  %s50 = sadd.s32 0, 0
  %s51 = smul.u32 2, %s50
  %p52 = scmp.lt.s32.totalorder %s51, 1
  %s53 = scalar_select %p52, %s51, 1
  %s54 = smul.addr %s53, 8
  %s55 = scalar_lea.vmem %s1, %s54
  %s56 = sadd.s32 0, 0
  %s57 = smul.u32 2, %s56
  %p58 = scmp.eq.s32.totalorder 0, 0
  // Predicated region
  $region10: #{scale_invariant_loss.1} parent=0 // pred_check
    %p59 = pneg %p58
  $region11: #{scale_invariant_loss.1} parent=0 // pred_check_branch
    %61 = sbr.rel (%p59) target = $region13
  $region12: #{scale_invariant_loss.1} parent=0 // pred_region
    %62 = vst [vmem:[%s2] sm:$0xff] 0.0
    %63 = vst [vmem:[%s3] sm:$0xff] 0.0
    %64 = vst [vmem:[%s4] sm:$0xff] 0.0
  $region13: #{scale_invariant_loss.1} parent=0 // pred_fallthru
    _
  %v65 = vld [vmem:[%s47] sm:$0xff]
  %v66 = vld [vmem:[%s47 + $0x8] sm:$0xff]
  %v67 = vld [vmem:[%s55] sm:$0xff]
  %v68 = vld [vmem:[%s55 + $0x8] sm:$0xff]
  %vm69 = vcmp.le.f32.partialorder %v67, 2.0
  %vm70 = vcmp.le.f32.partialorder %v68, 2.0
  %vm71 = vcmp.ge.f32.partialorder %v67, 0.1
  %vm72 = vcmp.ge.f32.partialorder %v68, 0.1
  %vm73 = vmand %vm69, %vm71
  %vm74 = vmand %vm70, %vm72
  %v75 = vsel %vm73, %v67, 1.0
  %v76 = vsel %vm74, %v68, 1.0
  %v77 = vlog2.pop %v75
  %v78 = vmul.f32 %v77, 0.6931472
  %v79 = vlog2.pop %v76
  %v80 = vmul.f32 %v79, 0.6931472
  %v81 = vsel %vm73, %v65, 0.0
  %v82 = vsel %vm74, %v66, 0.0
  %v83 = vadd.f32 %v81, %v78
  %v84 = vadd.f32 %v82, %v80
  %v85 = vsel %vm73, 1, 0
  %v86 = vsel %vm74, 1, 0
  %v87 = vcvt.s32.f32 %v85
  %v88 = vcvt.s32.f32 %v86
  %v89 = vld [vmem:[%s2] sm:$0xff]
  %v90 = vadd.f32 %v83, %v84
  %v91 = vadd.f32 %v89, %v90
  %92 = vst [vmem:[%s2] sm:$0xff] %v91
  %v93 = vld [vmem:[%s3] sm:$0xff]
  %v94 = vmul.f32 %v83, %v83
  %v95 = vmul.f32 %v84, %v84
  %v96 = vadd.f32 %v94, %v95
  %v97 = vadd.f32 %v93, %v96
  %98 = vst [vmem:[%s3] sm:$0xff] %v97
  %v99 = vld [vmem:[%s4] sm:$0xff]
  %v100 = vadd.f32 %v87, %v88
  %v101 = vadd.f32 %v99, %v100
  %102 = vst [vmem:[%s4] sm:$0xff] %v101
  // Predicated region
  $region14: #{scale_invariant_loss.1} parent=0 // pred_check
    _
  $region15: #{scale_invariant_loss.1} parent=0 // pred_check_branch
    %104 = sbr.rel (0) target = $region17
  $region16: #{scale_invariant_loss.1} parent=0 // pred_region
    _
  $region17: #{scale_invariant_loss.1} parent=0 // pred_fallthru
    _
  // Predicated region
  $region18: #{scale_invariant_loss.1} parent=0 // pred_check
    _
  $region19: #{scale_invariant_loss.1} parent=0 // pred_check_branch
    %106 = sbr.rel (0) target = $region21
  $region20: #{scale_invariant_loss.1} parent=0 // pred_region
    _
  $region21: #{scale_invariant_loss.1} parent=0 // pred_fallthru
    _
  // Predicated region
  $region22: #{scale_invariant_loss.1} parent=0 // pred_check
    _
  $region23: #{scale_invariant_loss.1} parent=0 // pred_check_branch
    %108 = sbr.rel (0) target = $region25
  $region24: #{scale_invariant_loss.1} parent=0 // pred_region
    _
  $region25: #{scale_invariant_loss.1} parent=0 // pred_fallthru
    _
  // Predicated region
  $region26: #{scale_invariant_loss.1} parent=0 // pred_check
    _
  $region27: #{scale_invariant_loss.1} parent=0 // pred_check_branch
    %110 = sbr.rel (0) target = $region29
  $region28: #{scale_invariant_loss.1} parent=0 // pred_region
    _
  $region29: #{scale_invariant_loss.1} parent=0 // pred_fallthru
    _
  // Predicated region
  $region30: #{scale_invariant_loss.1} parent=0 // pred_check
    _
  $region31: #{scale_invariant_loss.1} parent=0 // pred_check_branch
    %112 = sbr.rel (0) target = $region33
  $region32: #{scale_invariant_loss.1} parent=0 // pred_region
    _
  $region33: #{scale_invariant_loss.1} parent=0 // pred_fallthru
    _
  // Predicated region
  $region34: #{scale_invariant_loss.1} parent=0 // pred_check
    _
  $region35: #{scale_invariant_loss.1} parent=0 // pred_check_branch
    %114 = sbr.rel (0) target = $region37
  $region36: #{scale_invariant_loss.1} parent=0 // pred_region
    _
  $region37: #{scale_invariant_loss.1} parent=0 // pred_fallthru
    _

</llo_original>
